<compile_context>
chip_gen: v5e
topology: v5e:2x2
jax: 0.10.0
libtpu: 0.0.40
codegen_flags: <defaults>
</compile_context>

<pallas_src>
import jax
import jax.numpy as jnp
from jax.experimental import pallas as pl
from jax.experimental.pallas import tpu as pltpu


def _round_up(x, m):
    return ((x + m - 1) // m) * m


def tsn_head_kernel(x_ref, w_ref, b_ref, o_ref, acc_ref):
    # x_ref:   (TN, THW, C) activation dtype (bf16 or f32)
    # w_ref:   (C, Kp)      bf16, pre-transposed, pre-scaled by 1/HW, K padded to Kp
    # b_ref:   (1, Kp)      f32, K padded to Kp
    # o_ref:   (TN, Kp)     f32
    # acc_ref: (TN, C)      f32 scratch accumulator (persists across the HW grid axis)
    j = pl.program_id(1)

    @pl.when(j == 0)
    def _():
        acc_ref[...] = jnp.zeros_like(acc_ref)

    # Pool accumulation in f32 (v5e VPU has no bf16 math). Zero-padded HW rows add 0.
    acc_ref[...] += jnp.sum(x_ref[...].astype(jnp.float32), axis=1)

    # TODO(synk): Dropout is identity in eval mode; training-mode dropout (PRNG mask)
    # is not implemented here.
    @pl.when(j == pl.num_programs(1) - 1)
    def _():
        logits = jnp.dot(acc_ref[...].astype(w_ref.dtype), w_ref[...],
                         preferred_element_type=jnp.float32)  # MXU, f32 accumulate
        o_ref[...] = logits + b_ref[...]  # Kp multiple of 128 -> unmasked vst


def prepare_tsn_head_params(fc_weight, fc_bias, hw, *, mxu_dtype=jnp.bfloat16):
    """One-time prep: transpose, fold in the 1/HW pooling scale, pad K to 128, cast."""
    K, C = fc_weight.shape
    Kp = _round_up(K, 128)
    w = fc_weight.T.astype(jnp.float32) * (1.0 / float(hw))          # (C, K)
    w = jnp.pad(w, ((0, 0), (0, Kp - K))).astype(mxu_dtype)          # (C, Kp)
    b = jnp.pad(fc_bias.astype(jnp.float32), (0, Kp - K)).reshape(1, Kp)
    return w, b


def _choose_tiles(N, HW, C, itemsize, *, tile_n, x_buf_budget_bytes=8 << 20):
    """Pick (TN, THW) so one x tile stays within the per-buffer VMEM budget."""
    tn = min(tile_n, _round_up(N, 8))
    bytes_per_spatial_row = max(1, tn * C * itemsize)
    max_thw = max(8, (x_buf_budget_bytes // bytes_per_spatial_row) // 8 * 8)
    thw = min(_round_up(HW, 8), max_thw)
    return tn, thw


def tsn_head_forward(x_nhwc_flat, w_prepped, b_prepped, num_classes, *, tile_n=128):
    """x_nhwc_flat: (N, H*W, C) channels-last flattened activations (any float dtype)."""
    N, HW, C = x_nhwc_flat.shape
    Kp = w_prepped.shape[1]
    itemsize = jnp.dtype(x_nhwc_flat.dtype).itemsize

    tn, thw = _choose_tiles(N, HW, C, itemsize, tile_n=tile_n)
    Np = _round_up(N, tn)
    HWp = _round_up(HW, thw)
    if Np != N or HWp != HW:
        # Zero padding: padded HW rows contribute 0 to the sum; padded N rows are
        # sliced off below.
        x_nhwc_flat = jnp.pad(x_nhwc_flat, ((0, Np - N), (0, HWp - HW), (0, 0)))

    cost = pl.CostEstimate(
        flops=2 * Np * C * Kp + Np * HWp * C,
        transcendentals=0,
        bytes_accessed=(Np * HWp * C * itemsize
                        + w_prepped.size * jnp.dtype(w_prepped.dtype).itemsize
                        + b_prepped.size * 4
                        + Np * Kp * 4),
    )

    out = pl.pallas_call(
        tsn_head_kernel,
        out_shape=jax.ShapeDtypeStruct((Np, Kp), jnp.float32),
        grid=(Np // tn, HWp // thw),
        in_specs=[
            # x tile streams over (N tile, HW chunk); double-buffered by the pipeline.
            pl.BlockSpec((tn, thw, C), lambda i, j: (i, j, 0)),
            # weight / bias: constant block index -> VMEM-resident across the grid.
            pl.BlockSpec((C, Kp), lambda i, j: (0, 0)),
            pl.BlockSpec((1, Kp), lambda i, j: (0, 0)),
        ],
        # Output block index constant over the HW reduction axis -> written once at the
        # last HW step of each N tile.
        out_specs=pl.BlockSpec((tn, Kp), lambda i, j: (i, 0)),
        scratch_shapes=[pltpu.VMEM((tn, C), jnp.float32)],
        compiler_params=pltpu.CompilerParams(
            dimension_semantics=("parallel", "arbitrary")),
        cost_estimate=cost,
    )(x_nhwc_flat, w_prepped, b_prepped)

    return out[:N, :num_classes]


def tsn_head_forward_nchw(x_nchw, fc_weight, fc_bias, *, tile_n=128):
    """Convenience wrapper taking PyTorch NCHW activations and raw (K, C) / (K,) fc params.

    Production callers should feed (N, HW, C) activations straight from the backbone and
    call prepare_tsn_head_params() once, keeping the transpose / weight prep off the
    per-step path.
    """
    N, C, H, W = x_nchw.shape
    x_nhwc = jnp.transpose(x_nchw, (0, 2, 3, 1)).reshape(N, H * W, C)
    w, b = prepare_tsn_head_params(fc_weight, fc_bias, H * W)
    return tsn_head_forward(x_nhwc, w, b, fc_weight.shape[0], tile_n=tile_n)


if __name__ == "__main__":
    # Deterministic synthetic config: FEATURE_DIMS=32, NUM_CLASSES=16, DROPOUT eval-mode.
    N, C, H, W = 2, 32, 16, 16
    K = 16

    key = jax.random.PRNGKey(0)
    kx, kw, kb = jax.random.split(key, 3)
    # Simulate a bf16 backbone output: the wrapper keeps bf16 through the DMA.
    x = jax.random.normal(kx, (N, C, H, W), dtype=jnp.float32).astype(jnp.bfloat16)
    fc_weight = jax.random.normal(kw, (K, C), dtype=jnp.float32) * 0.02   # (out, in)
    fc_bias = jax.random.normal(kb, (K,), dtype=jnp.float32) * 0.01

    out = tsn_head_forward_nchw(x, fc_weight, fc_bias)
    out = jax.block_until_ready(out)

    # Pure-JAX reference of the module's math (f32) on the same bf16 activations.
    xf = x.astype(jnp.float32)
    ref = jnp.mean(xf.reshape(N, C, H * W), axis=-1) @ fc_weight.T + fc_bias

    assert out.shape == (N, K)
    assert out.dtype == jnp.float32
    # bf16 MXU operands (f32 accumulate) -> slightly looser tolerance than pure f32.
    assert jnp.allclose(out, ref, atol=2e-3, rtol=2e-2)

    print("KERNEL_OK")
</pallas_src>

<mosaic_0001>
module attributes {stable_mosaic.version = 11 : i64} {
  func.func @tsn_head_kernel(%arg0: i32, %arg1: i32, %arg2: memref<8x256x32xbf16, #tpu.memory_space<vmem>>, %arg3: memref<32x128xbf16, #tpu.memory_space<vmem>>, %arg4: memref<1x128xf32, #tpu.memory_space<vmem>>, %arg5: memref<8x128xf32, #tpu.memory_space<vmem>>, %arg6: memref<8x32xf32, #tpu.memory_space<vmem>>) attributes {dimension_semantics = [#tpu.dimension_semantics<parallel>, #tpu.dimension_semantics<arbitrary>], iteration_bounds = array<i64: 1, 1>, scalar_prefetch = 0 : i64, scratch_operands = 1 : i64, tpu.core_type = #tpu.core_type<tc>, window_params = [{transform_indices = @transform_0, window_bounds = array<i64: 8, 256, 32>}, {pipeline_mode = #tpu.pipeline_mode<synchronous>, transform_indices = @transform_1, window_bounds = array<i64: 32, 128>}, {pipeline_mode = #tpu.pipeline_mode<synchronous>, transform_indices = @transform_2, window_bounds = array<i64: 1, 128>}, {transform_indices = @transform_3, window_bounds = array<i64: 8, 128>}]} {
    %c0_i32 = arith.constant 0 : i32
    %0 = arith.cmpi eq, %arg1, %c0_i32 : i32
    %1 = arith.extui %0 : i1 to i32
    %c0_i32_0 = arith.constant 0 : i32
    %2 = arith.cmpi ne, %1, %c0_i32_0 : i32
    scf.if %2 {
      %cst_9 = arith.constant 0.000000e+00 : f32
      %12 = vector.broadcast %cst_9 : f32 to vector<8x32xf32>
      %c0_10 = arith.constant 0 : index
      %c0_11 = arith.constant 0 : index
      %13 = vector.load %arg6[%c0_10, %c0_11] : memref<8x32xf32, #tpu.memory_space<vmem>>, vector<8x32xf32>
      tpu.vector_store %arg6[%c0_10, %c0_11], %12 {strides = array<i32>} : memref<8x32xf32, #tpu.memory_space<vmem>>, vector<8x32xf32>,
    } else {
    }
    %c0 = arith.constant 0 : index
    %c0_1 = arith.constant 0 : index
    %3 = vector.load %arg6[%c0, %c0_1] : memref<8x32xf32, #tpu.memory_space<vmem>>, vector<8x32xf32>
    %c0_2 = arith.constant 0 : index
    %c0_3 = arith.constant 0 : index
    %c0_4 = arith.constant 0 : index
    %4 = vector.load %arg2[%c0_2, %c0_3, %c0_4] : memref<8x256x32xbf16, #tpu.memory_space<vmem>>, vector<8x256x32xbf16>
    %5 = arith.extf %4 : vector<8x256x32xbf16> to vector<8x256x32xf32>
    %cst = arith.constant dense<0.000000e+00> : vector<8x32xf32>
    %6 = vector.multi_reduction <add>, %5, %cst [1] : vector<8x256x32xf32> to vector<8x32xf32>
    %7 = arith.addf %3, %6 : vector<8x32xf32>
    %c0_5 = arith.constant 0 : index
    %c0_6 = arith.constant 0 : index
    %8 = vector.load %arg6[%c0_5, %c0_6] : memref<8x32xf32, #tpu.memory_space<vmem>>, vector<8x32xf32>
    tpu.vector_store %arg6[%c0_5, %c0_6], %7 {strides = array<i32>} : memref<8x32xf32, #tpu.memory_space<vmem>>, vector<8x32xf32>,
    %c0_i32_7 = arith.constant 0 : i32
    %9 = arith.cmpi eq, %arg1, %c0_i32_7 : i32
    %10 = arith.extui %9 : i1 to i32
    %c0_i32_8 = arith.constant 0 : i32
    %11 = arith.cmpi ne, %10, %c0_i32_8 : i32
    scf.if %11 {
      %c0_9 = arith.constant 0 : index
      %c0_10 = arith.constant 0 : index
      %12 = vector.load %arg6[%c0_9, %c0_10] : memref<8x32xf32, #tpu.memory_space<vmem>>, vector<8x32xf32>
      %13 = arith.truncf %12 : vector<8x32xf32> to vector<8x32xbf16>
      %c0_11 = arith.constant 0 : index
      %c0_12 = arith.constant 0 : index
      %14 = vector.load %arg3[%c0_11, %c0_12] : memref<32x128xbf16, #tpu.memory_space<vmem>>, vector<32x128xbf16>
      %cst_13 = arith.constant dense<0.000000e+00> : vector<8x128xf32>
      %15 = tpu.matmul %13, %14, %cst_13 {dimension_numbers = #tpu.dot_dimension_numbers<[1], [0], [0], [1], [0, 0, 1, 1], [], []>} : vector<8x32xbf16>, vector<32x128xbf16>, vector<8x128xf32> -> vector<8x128xf32>
      %c0_14 = arith.constant 0 : index
      %c0_15 = arith.constant 0 : index
      %16 = vector.load %arg4[%c0_14, %c0_15] : memref<1x128xf32, #tpu.memory_space<vmem>>, vector<1x128xf32>
      %17 = vector.broadcast %16 : vector<1x128xf32> to vector<8x128xf32>
      %18 = arith.addf %15, %17 : vector<8x128xf32>
      %c0_16 = arith.constant 0 : index
      %c0_17 = arith.constant 0 : index
      %19 = vector.load %arg5[%c0_16, %c0_17] : memref<8x128xf32, #tpu.memory_space<vmem>>, vector<8x128xf32>
      tpu.vector_store %arg5[%c0_16, %c0_17], %18 {strides = array<i32>} : memref<8x128xf32, #tpu.memory_space<vmem>>, vector<8x128xf32>,
    } else {
    }
    return
  }
  func.func @transform_0(%arg0: i32, %arg1: i32) -> (i32, i32, i32) {
    %c0_i32 = arith.constant 0 : i32
    %c0_i32_0 = arith.constant 0 : i32
    return %arg0, %arg1, %c0_i32 : i32, i32, i32
  }
  func.func @transform_1(%arg0: i32, %arg1: i32) -> (i32, i32) {
    %c0_i32 = arith.constant 0 : i32
    %c0_i32_0 = arith.constant 0 : i32
    %c0_i32_1 = arith.constant 0 : i32
    return %c0_i32, %c0_i32_0 : i32, i32
  }
  func.func @transform_2(%arg0: i32, %arg1: i32) -> (i32, i32) {
    %c0_i32 = arith.constant 0 : i32
    %c0_i32_0 = arith.constant 0 : i32
    %c0_i32_1 = arith.constant 0 : i32
    return %c0_i32, %c0_i32_0 : i32, i32
  }
  func.func @transform_3(%arg0: i32, %arg1: i32) -> (i32, i32) {
    %c0_i32 = arith.constant 0 : i32
    %c0_i32_0 = arith.constant 0 : i32
    return %arg0, %c0_i32 : i32, i32
  }
}

</mosaic_0001>

<llo_original>
// kernel: tpu_custom_call.1
$region0: #{tpu_custom_call.1}
  #allocation0 [shape = 'u32[]', space=smem, size = 0x4, offset = 0x4, fixed_abs, tag = 'smem constant byte address 0x4 - core index']
  #allocation1 [shape = 'u32[72,128]{1,0:T(1,128)}', space=vmem, size = 0x9000, scoped, tag = 'internal scratch']
  #allocation2 [shape = 'f32[8,32]{1,0:T(8,128)}', space=vmem, size = 0x1000, scoped, tag = 'scratch operand']
  %s0 = inlined_call_operand.vmem [shape: bf16[8,256,32], index: 0, kind: input, shape index: {}]
  %s1 = inlined_call_operand.vmem [shape: bf16[32,128], index: 1, kind: input, shape index: {}]
  %s2 = inlined_call_operand.vmem [shape: f32[1,128], index: 2, kind: input, shape index: {}]
  %s3 = inlined_call_operand.hbm [shape: f32[8,128], index: 3, kind: output, shape index: {}]
  %s4 = sld [smem:[#allocation0]]
  $region30: #{tpu_custom_call.1} parent=0
    _
  %s6 = ssub.s32 1, %s4
  %s7 = scalar_select 0, %s6, %s4
  $region1: #{tpu_custom_call.1} parent=0
    #allocation3 [shape = 'u8[4096]{0}', space=vmem, size = 0x1000, scoped, tag = 'output window, operand 0, single buffered']
    #allocation4 [shape = 's32[1]{0}', space=sflag, size = 0x4, scoped, tag = 'scoped memory for tpu_custom_call.1']
    %8 = vsyncpa [#allocation4], 0
    // Predicated region
    $region2: #{tpu_custom_call.1} parent=1 // pred_check
      _
    $region3: #{tpu_custom_call.1} parent=1 // pred_check_branch
      %10 = sbr.rel (0) target = $region5
    $region4: #{tpu_custom_call.1} parent=1 // pred_region
      _
    $region5: #{tpu_custom_call.1} parent=1 // pred_fallthru
      _
    // Predicated region
    $region6: #{tpu_custom_call.1} parent=1 // pred_check
      _
    $region7: #{tpu_custom_call.1} parent=1 // pred_check_branch
      %12 = sbr.rel (0) target = $region9
    $region8: #{tpu_custom_call.1} parent=1 // pred_region
      _
    $region9: #{tpu_custom_call.1} parent=1 // pred_fallthru
      _
    // Predicated region
    $region10: #{tpu_custom_call.1} parent=1 // pred_check
      _
    $region11: #{tpu_custom_call.1} parent=1 // pred_check_branch
      %14 = sbr.rel (0) target = $region13
    $region12: #{tpu_custom_call.1} parent=1 // pred_region
      _
    $region13: #{tpu_custom_call.1} parent=1 // pred_fallthru
      _
    %p16 = scmp.eq.s32.totalorder 0, 0
    // Predicated region
    $region14: #{tpu_custom_call.1} parent=1 // pred_check
      %p17 = pneg %p16
    $region15: #{tpu_custom_call.1} parent=1 // pred_check_branch
      %19 = sbr.rel (%p17) target = $region17
    $region16: #{tpu_custom_call.1} parent=1 // pred_region
      %vm20 = vcmask 261120
      %21 = vst.msk [vmem:[#allocation2] sm:$0xff] %vm20, 0.0
    $region17: #{tpu_custom_call.1} parent=1 // pred_fallthru
      _
    %v22 = vld [vmem:[#allocation2] sm:$0xff]
    %v23 = vld [vmem:[%s0] sm:$0xf]
    %v24 = vld [vmem:[%s0 + $0x4] sm:$0xf]
    %v25 = vld [vmem:[%s0 + $0x8] sm:$0xf]
    %v26 = vld [vmem:[%s0 + $0xc] sm:$0xf]
    %v27 = vld [vmem:[%s0 + $0x10] sm:$0xf]
    %v28 = vld [vmem:[%s0 + $0x14] sm:$0xf]
    %v29 = vld [vmem:[%s0 + $0x18] sm:$0xf]
    %v30 = vld [vmem:[%s0 + $0x1c] sm:$0xf]
    %v31 = vld [vmem:[%s0 + $0x20] sm:$0xf]
    %v32 = vld [vmem:[%s0 + $0x24] sm:$0xf]
    %v33 = vld [vmem:[%s0 + $0x28] sm:$0xf]
    %v34 = vld [vmem:[%s0 + $0x2c] sm:$0xf]
    %v35 = vld [vmem:[%s0 + $0x30] sm:$0xf]
    %v36 = vld [vmem:[%s0 + $0x34] sm:$0xf]
    %v37 = vld [vmem:[%s0 + $0x38] sm:$0xf]
    %v38 = vld [vmem:[%s0 + $0x3c] sm:$0xf]
    %v39 = vld [vmem:[%s0 + $0x40] sm:$0xf]
    %v40 = vld [vmem:[%s0 + $0x44] sm:$0xf]
    %v41 = vld [vmem:[%s0 + $0x48] sm:$0xf]
    %v42 = vld [vmem:[%s0 + $0x4c] sm:$0xf]
    %v43 = vld [vmem:[%s0 + $0x50] sm:$0xf]
    %v44 = vld [vmem:[%s0 + $0x54] sm:$0xf]
    %v45 = vld [vmem:[%s0 + $0x58] sm:$0xf]
    %v46 = vld [vmem:[%s0 + $0x5c] sm:$0xf]
    %v47 = vld [vmem:[%s0 + $0x60] sm:$0xf]
    %v48 = vld [vmem:[%s0 + $0x64] sm:$0xf]
    %v49 = vld [vmem:[%s0 + $0x68] sm:$0xf]
    %v50 = vld [vmem:[%s0 + $0x6c] sm:$0xf]
    %v51 = vld [vmem:[%s0 + $0x70] sm:$0xf]
    %v52 = vld [vmem:[%s0 + $0x74] sm:$0xf]
    %v53 = vld [vmem:[%s0 + $0x78] sm:$0xf]
    %v54 = vld [vmem:[%s0 + $0x7c] sm:$0xf]
    %v55 = vld [vmem:[%s0 + $0x80] sm:$0xf]
    %v56 = vld [vmem:[%s0 + $0x84] sm:$0xf]
    %v57 = vld [vmem:[%s0 + $0x88] sm:$0xf]
    %v58 = vld [vmem:[%s0 + $0x8c] sm:$0xf]
    %v59 = vld [vmem:[%s0 + $0x90] sm:$0xf]
    %v60 = vld [vmem:[%s0 + $0x94] sm:$0xf]
    %v61 = vld [vmem:[%s0 + $0x98] sm:$0xf]
    %v62 = vld [vmem:[%s0 + $0x9c] sm:$0xf]
    %v63 = vld [vmem:[%s0 + $0xa0] sm:$0xf]
    %v64 = vld [vmem:[%s0 + $0xa4] sm:$0xf]
    %v65 = vld [vmem:[%s0 + $0xa8] sm:$0xf]
    %v66 = vld [vmem:[%s0 + $0xac] sm:$0xf]
    %v67 = vld [vmem:[%s0 + $0xb0] sm:$0xf]
    %v68 = vld [vmem:[%s0 + $0xb4] sm:$0xf]
    %v69 = vld [vmem:[%s0 + $0xb8] sm:$0xf]
    %v70 = vld [vmem:[%s0 + $0xbc] sm:$0xf]
    %v71 = vld [vmem:[%s0 + $0xc0] sm:$0xf]
    %v72 = vld [vmem:[%s0 + $0xc4] sm:$0xf]
    %v73 = vld [vmem:[%s0 + $0xc8] sm:$0xf]
    %v74 = vld [vmem:[%s0 + $0xcc] sm:$0xf]
    %v75 = vld [vmem:[%s0 + $0xd0] sm:$0xf]
    %v76 = vld [vmem:[%s0 + $0xd4] sm:$0xf]
    %v77 = vld [vmem:[%s0 + $0xd8] sm:$0xf]
    %v78 = vld [vmem:[%s0 + $0xdc] sm:$0xf]
    %v79 = vld [vmem:[%s0 + $0xe0] sm:$0xf]
    %v80 = vld [vmem:[%s0 + $0xe4] sm:$0xf]
    %v81 = vld [vmem:[%s0 + $0xe8] sm:$0xf]
    %v82 = vld [vmem:[%s0 + $0xec] sm:$0xf]
    %v83 = vld [vmem:[%s0 + $0xf0] sm:$0xf]
    %v84 = vld [vmem:[%s0 + $0xf4] sm:$0xf]
    %v85 = vld [vmem:[%s0 + $0xf8] sm:$0xf]
    %v86 = vld [vmem:[%s0 + $0xfc] sm:$0xf]
    %v87 = vld [vmem:[%s0 + $0x100] sm:$0xf]
    %v88 = vld [vmem:[%s0 + $0x104] sm:$0xf]
    %v89 = vld [vmem:[%s0 + $0x108] sm:$0xf]
    %v90 = vld [vmem:[%s0 + $0x10c] sm:$0xf]
    %v91 = vld [vmem:[%s0 + $0x110] sm:$0xf]
    %v92 = vld [vmem:[%s0 + $0x114] sm:$0xf]
    %v93 = vld [vmem:[%s0 + $0x118] sm:$0xf]
    %v94 = vld [vmem:[%s0 + $0x11c] sm:$0xf]
    %v95 = vld [vmem:[%s0 + $0x120] sm:$0xf]
    %v96 = vld [vmem:[%s0 + $0x124] sm:$0xf]
    %v97 = vld [vmem:[%s0 + $0x128] sm:$0xf]
    %v98 = vld [vmem:[%s0 + $0x12c] sm:$0xf]
    %v99 = vld [vmem:[%s0 + $0x130] sm:$0xf]
    %v100 = vld [vmem:[%s0 + $0x134] sm:$0xf]
    %v101 = vld [vmem:[%s0 + $0x138] sm:$0xf]
    %v102 = vld [vmem:[%s0 + $0x13c] sm:$0xf]
    %v103 = vld [vmem:[%s0 + $0x140] sm:$0xf]
    %v104 = vld [vmem:[%s0 + $0x144] sm:$0xf]
    %v105 = vld [vmem:[%s0 + $0x148] sm:$0xf]
    %v106 = vld [vmem:[%s0 + $0x14c] sm:$0xf]
    %v107 = vld [vmem:[%s0 + $0x150] sm:$0xf]
    %v108 = vld [vmem:[%s0 + $0x154] sm:$0xf]
    %v109 = vld [vmem:[%s0 + $0x158] sm:$0xf]
    %v110 = vld [vmem:[%s0 + $0x15c] sm:$0xf]
    %v111 = vld [vmem:[%s0 + $0x160] sm:$0xf]
    %v112 = vld [vmem:[%s0 + $0x164] sm:$0xf]
    %v113 = vld [vmem:[%s0 + $0x168] sm:$0xf]
    %v114 = vld [vmem:[%s0 + $0x16c] sm:$0xf]
    %v115 = vld [vmem:[%s0 + $0x170] sm:$0xf]
    %v116 = vld [vmem:[%s0 + $0x174] sm:$0xf]
    %v117 = vld [vmem:[%s0 + $0x178] sm:$0xf]
    %v118 = vld [vmem:[%s0 + $0x17c] sm:$0xf]
    %v119 = vld [vmem:[%s0 + $0x180] sm:$0xf]
    %v120 = vld [vmem:[%s0 + $0x184] sm:$0xf]
    %v121 = vld [vmem:[%s0 + $0x188] sm:$0xf]
    %v122 = vld [vmem:[%s0 + $0x18c] sm:$0xf]
    %v123 = vld [vmem:[%s0 + $0x190] sm:$0xf]
    %v124 = vld [vmem:[%s0 + $0x194] sm:$0xf]
    %v125 = vld [vmem:[%s0 + $0x198] sm:$0xf]
    %v126 = vld [vmem:[%s0 + $0x19c] sm:$0xf]
    %v127 = vld [vmem:[%s0 + $0x1a0] sm:$0xf]
    %v128 = vld [vmem:[%s0 + $0x1a4] sm:$0xf]
    %v129 = vld [vmem:[%s0 + $0x1a8] sm:$0xf]
    %v130 = vld [vmem:[%s0 + $0x1ac] sm:$0xf]
    %v131 = vld [vmem:[%s0 + $0x1b0] sm:$0xf]
    %v132 = vld [vmem:[%s0 + $0x1b4] sm:$0xf]
    %v133 = vld [vmem:[%s0 + $0x1b8] sm:$0xf]
    %v134 = vld [vmem:[%s0 + $0x1bc] sm:$0xf]
    %v135 = vld [vmem:[%s0 + $0x1c0] sm:$0xf]
    %v136 = vld [vmem:[%s0 + $0x1c4] sm:$0xf]
    %v137 = vld [vmem:[%s0 + $0x1c8] sm:$0xf]
    %v138 = vld [vmem:[%s0 + $0x1cc] sm:$0xf]
    %v139 = vld [vmem:[%s0 + $0x1d0] sm:$0xf]
    %v140 = vld [vmem:[%s0 + $0x1d4] sm:$0xf]
    %v141 = vld [vmem:[%s0 + $0x1d8] sm:$0xf]
    %v142 = vld [vmem:[%s0 + $0x1dc] sm:$0xf]
    %v143 = vld [vmem:[%s0 + $0x1e0] sm:$0xf]
    %v144 = vld [vmem:[%s0 + $0x1e4] sm:$0xf]
    %v145 = vld [vmem:[%s0 + $0x1e8] sm:$0xf]
    %v146 = vld [vmem:[%s0 + $0x1ec] sm:$0xf]
    %v147 = vld [vmem:[%s0 + $0x1f0] sm:$0xf]
    %v148 = vld [vmem:[%s0 + $0x1f4] sm:$0xf]
    %v149 = vld [vmem:[%s0 + $0x1f8] sm:$0xf]
    %v150 = vld [vmem:[%s0 + $0x1fc] sm:$0xf]
    %v151 = vld [vmem:[%s0 + $0x200] sm:$0xf]
    %v152 = vld [vmem:[%s0 + $0x204] sm:$0xf]
    %v153 = vld [vmem:[%s0 + $0x208] sm:$0xf]
    %v154 = vld [vmem:[%s0 + $0x20c] sm:$0xf]
    %v155 = vld [vmem:[%s0 + $0x210] sm:$0xf]
    %v156 = vld [vmem:[%s0 + $0x214] sm:$0xf]
    %v157 = vld [vmem:[%s0 + $0x218] sm:$0xf]
    %v158 = vld [vmem:[%s0 + $0x21c] sm:$0xf]
    %v159 = vld [vmem:[%s0 + $0x220] sm:$0xf]
    %v160 = vld [vmem:[%s0 + $0x224] sm:$0xf]
    %v161 = vld [vmem:[%s0 + $0x228] sm:$0xf]
    %v162 = vld [vmem:[%s0 + $0x22c] sm:$0xf]
    %v163 = vld [vmem:[%s0 + $0x230] sm:$0xf]
    %v164 = vld [vmem:[%s0 + $0x234] sm:$0xf]
    %v165 = vld [vmem:[%s0 + $0x238] sm:$0xf]
    %v166 = vld [vmem:[%s0 + $0x23c] sm:$0xf]
    %v167 = vld [vmem:[%s0 + $0x240] sm:$0xf]
    %v168 = vld [vmem:[%s0 + $0x244] sm:$0xf]
    %v169 = vld [vmem:[%s0 + $0x248] sm:$0xf]
    %v170 = vld [vmem:[%s0 + $0x24c] sm:$0xf]
    %v171 = vld [vmem:[%s0 + $0x250] sm:$0xf]
    %v172 = vld [vmem:[%s0 + $0x254] sm:$0xf]
    %v173 = vld [vmem:[%s0 + $0x258] sm:$0xf]
    %v174 = vld [vmem:[%s0 + $0x25c] sm:$0xf]
    %v175 = vld [vmem:[%s0 + $0x260] sm:$0xf]
    %v176 = vld [vmem:[%s0 + $0x264] sm:$0xf]
    %v177 = vld [vmem:[%s0 + $0x268] sm:$0xf]
    %v178 = vld [vmem:[%s0 + $0x26c] sm:$0xf]
    %v179 = vld [vmem:[%s0 + $0x270] sm:$0xf]
    %v180 = vld [vmem:[%s0 + $0x274] sm:$0xf]
    %v181 = vld [vmem:[%s0 + $0x278] sm:$0xf]
    %v182 = vld [vmem:[%s0 + $0x27c] sm:$0xf]
    %v183 = vld [vmem:[%s0 + $0x280] sm:$0xf]
    %v184 = vld [vmem:[%s0 + $0x284] sm:$0xf]
    %v185 = vld [vmem:[%s0 + $0x288] sm:$0xf]
    %v186 = vld [vmem:[%s0 + $0x28c] sm:$0xf]
    %v187 = vld [vmem:[%s0 + $0x290] sm:$0xf]
    %v188 = vld [vmem:[%s0 + $0x294] sm:$0xf]
    %v189 = vld [vmem:[%s0 + $0x298] sm:$0xf]
    %v190 = vld [vmem:[%s0 + $0x29c] sm:$0xf]
    %v191 = vld [vmem:[%s0 + $0x2a0] sm:$0xf]
    %v192 = vld [vmem:[%s0 + $0x2a4] sm:$0xf]
    %v193 = vld [vmem:[%s0 + $0x2a8] sm:$0xf]
    %v194 = vld [vmem:[%s0 + $0x2ac] sm:$0xf]
    %v195 = vld [vmem:[%s0 + $0x2b0] sm:$0xf]
    %v196 = vld [vmem:[%s0 + $0x2b4] sm:$0xf]
    %v197 = vld [vmem:[%s0 + $0x2b8] sm:$0xf]
    %v198 = vld [vmem:[%s0 + $0x2bc] sm:$0xf]
    %v199 = vld [vmem:[%s0 + $0x2c0] sm:$0xf]
    %v200 = vld [vmem:[%s0 + $0x2c4] sm:$0xf]
    %v201 = vld [vmem:[%s0 + $0x2c8] sm:$0xf]
    %v202 = vld [vmem:[%s0 + $0x2cc] sm:$0xf]
    %v203 = vld [vmem:[%s0 + $0x2d0] sm:$0xf]
    %v204 = vld [vmem:[%s0 + $0x2d4] sm:$0xf]
    %v205 = vld [vmem:[%s0 + $0x2d8] sm:$0xf]
    %v206 = vld [vmem:[%s0 + $0x2dc] sm:$0xf]
    %v207 = vld [vmem:[%s0 + $0x2e0] sm:$0xf]
    %v208 = vld [vmem:[%s0 + $0x2e4] sm:$0xf]
    %v209 = vld [vmem:[%s0 + $0x2e8] sm:$0xf]
    %v210 = vld [vmem:[%s0 + $0x2ec] sm:$0xf]
    %v211 = vld [vmem:[%s0 + $0x2f0] sm:$0xf]
    %v212 = vld [vmem:[%s0 + $0x2f4] sm:$0xf]
    %v213 = vld [vmem:[%s0 + $0x2f8] sm:$0xf]
    %v214 = vld [vmem:[%s0 + $0x2fc] sm:$0xf]
    %v215 = vld [vmem:[%s0 + $0x300] sm:$0xf]
    %v216 = vld [vmem:[%s0 + $0x304] sm:$0xf]
    %v217 = vld [vmem:[%s0 + $0x308] sm:$0xf]
    %v218 = vld [vmem:[%s0 + $0x30c] sm:$0xf]
    %v219 = vld [vmem:[%s0 + $0x310] sm:$0xf]
    %v220 = vld [vmem:[%s0 + $0x314] sm:$0xf]
    %v221 = vld [vmem:[%s0 + $0x318] sm:$0xf]
    %v222 = vld [vmem:[%s0 + $0x31c] sm:$0xf]
    %v223 = vld [vmem:[%s0 + $0x320] sm:$0xf]
    %v224 = vld [vmem:[%s0 + $0x324] sm:$0xf]
    %v225 = vld [vmem:[%s0 + $0x328] sm:$0xf]
    %v226 = vld [vmem:[%s0 + $0x32c] sm:$0xf]
    %v227 = vld [vmem:[%s0 + $0x330] sm:$0xf]
    %v228 = vld [vmem:[%s0 + $0x334] sm:$0xf]
    %v229 = vld [vmem:[%s0 + $0x338] sm:$0xf]
    %v230 = vld [vmem:[%s0 + $0x33c] sm:$0xf]
    %v231 = vld [vmem:[%s0 + $0x340] sm:$0xf]
    %v232 = vld [vmem:[%s0 + $0x344] sm:$0xf]
    %v233 = vld [vmem:[%s0 + $0x348] sm:$0xf]
    %v234 = vld [vmem:[%s0 + $0x34c] sm:$0xf]
    %v235 = vld [vmem:[%s0 + $0x350] sm:$0xf]
    %v236 = vld [vmem:[%s0 + $0x354] sm:$0xf]
    %v237 = vld [vmem:[%s0 + $0x358] sm:$0xf]
    %v238 = vld [vmem:[%s0 + $0x35c] sm:$0xf]
    %v239 = vld [vmem:[%s0 + $0x360] sm:$0xf]
    %v240 = vld [vmem:[%s0 + $0x364] sm:$0xf]
    %v241 = vld [vmem:[%s0 + $0x368] sm:$0xf]
    %v242 = vld [vmem:[%s0 + $0x36c] sm:$0xf]
    %v243 = vld [vmem:[%s0 + $0x370] sm:$0xf]
    %v244 = vld [vmem:[%s0 + $0x374] sm:$0xf]
    %v245 = vld [vmem:[%s0 + $0x378] sm:$0xf]
    %v246 = vld [vmem:[%s0 + $0x37c] sm:$0xf]
    %v247 = vld [vmem:[%s0 + $0x380] sm:$0xf]
    %v248 = vld [vmem:[%s0 + $0x384] sm:$0xf]
    %v249 = vld [vmem:[%s0 + $0x388] sm:$0xf]
    %v250 = vld [vmem:[%s0 + $0x38c] sm:$0xf]
    %v251 = vld [vmem:[%s0 + $0x390] sm:$0xf]
    %v252 = vld [vmem:[%s0 + $0x394] sm:$0xf]
    %v253 = vld [vmem:[%s0 + $0x398] sm:$0xf]
    %v254 = vld [vmem:[%s0 + $0x39c] sm:$0xf]
    %v255 = vld [vmem:[%s0 + $0x3a0] sm:$0xf]
    %v256 = vld [vmem:[%s0 + $0x3a4] sm:$0xf]
    %v257 = vld [vmem:[%s0 + $0x3a8] sm:$0xf]
    %v258 = vld [vmem:[%s0 + $0x3ac] sm:$0xf]
    %v259 = vld [vmem:[%s0 + $0x3b0] sm:$0xf]
    %v260 = vld [vmem:[%s0 + $0x3b4] sm:$0xf]
    %v261 = vld [vmem:[%s0 + $0x3b8] sm:$0xf]
    %v262 = vld [vmem:[%s0 + $0x3bc] sm:$0xf]
    %v263 = vld [vmem:[%s0 + $0x3c0] sm:$0xf]
    %v264 = vld [vmem:[%s0 + $0x3c4] sm:$0xf]
    %v265 = vld [vmem:[%s0 + $0x3c8] sm:$0xf]
    %v266 = vld [vmem:[%s0 + $0x3cc] sm:$0xf]
    %v267 = vld [vmem:[%s0 + $0x3d0] sm:$0xf]
    %v268 = vld [vmem:[%s0 + $0x3d4] sm:$0xf]
    %v269 = vld [vmem:[%s0 + $0x3d8] sm:$0xf]
    %v270 = vld [vmem:[%s0 + $0x3dc] sm:$0xf]
    %v271 = vld [vmem:[%s0 + $0x3e0] sm:$0xf]
    %v272 = vld [vmem:[%s0 + $0x3e4] sm:$0xf]
    %v273 = vld [vmem:[%s0 + $0x3e8] sm:$0xf]
    %v274 = vld [vmem:[%s0 + $0x3ec] sm:$0xf]
    %v275 = vld [vmem:[%s0 + $0x3f0] sm:$0xf]
    %v276 = vld [vmem:[%s0 + $0x3f4] sm:$0xf]
    %v277 = vld [vmem:[%s0 + $0x3f8] sm:$0xf]
    %v278 = vld [vmem:[%s0 + $0x3fc] sm:$0xf]
    %v279 = vunpack.c.l.bf16 %v23
    %v280 = vunpack.c.l.bf16 %v24
    %v281 = vunpack.c.l.bf16 %v25
    %v282 = vunpack.c.l.bf16 %v26
    %v283 = vunpack.c.l.bf16 %v27
    %v284 = vunpack.c.l.bf16 %v28
    %v285 = vunpack.c.l.bf16 %v29
    %v286 = vunpack.c.l.bf16 %v30
    %v287 = vunpack.c.l.bf16 %v31
    %v288 = vunpack.c.l.bf16 %v32
    %v289 = vunpack.c.l.bf16 %v33
    %v290 = vunpack.c.l.bf16 %v34
    %v291 = vunpack.c.l.bf16 %v35
    %v292 = vunpack.c.l.bf16 %v36
    %v293 = vunpack.c.l.bf16 %v37
    %v294 = vunpack.c.l.bf16 %v38
    %v295 = vunpack.c.l.bf16 %v39
    %v296 = vunpack.c.l.bf16 %v40
    %v297 = vunpack.c.l.bf16 %v41
    %v298 = vunpack.c.l.bf16 %v42
    %v299 = vunpack.c.l.bf16 %v43
    %v300 = vunpack.c.l.bf16 %v44
    %v301 = vunpack.c.l.bf16 %v45
    %v302 = vunpack.c.l.bf16 %v46
    %v303 = vunpack.c.l.bf16 %v47
    %v304 = vunpack.c.l.bf16 %v48
    %v305 = vunpack.c.l.bf16 %v49
    %v306 = vunpack.c.l.bf16 %v50
    %v307 = vunpack.c.l.bf16 %v51
    %v308 = vunpack.c.l.bf16 %v52
    %v309 = vunpack.c.l.bf16 %v53
    %v310 = vunpack.c.l.bf16 %v54
    %v311 = vunpack.c.l.bf16 %v55
    %v312 = vunpack.c.l.bf16 %v56
    %v313 = vunpack.c.l.bf16 %v57
    %v314 = vunpack.c.l.bf16 %v58
    %v315 = vunpack.c.l.bf16 %v59
    %v316 = vunpack.c.l.bf16 %v60
    %v317 = vunpack.c.l.bf16 %v61
    %v318 = vunpack.c.l.bf16 %v62
    %v319 = vunpack.c.l.bf16 %v63
    %v320 = vunpack.c.l.bf16 %v64
    %v321 = vunpack.c.l.bf16 %v65
    %v322 = vunpack.c.l.bf16 %v66
    %v323 = vunpack.c.l.bf16 %v67
    %v324 = vunpack.c.l.bf16 %v68
    %v325 = vunpack.c.l.bf16 %v69
    %v326 = vunpack.c.l.bf16 %v70
    %v327 = vunpack.c.l.bf16 %v71
    %v328 = vunpack.c.l.bf16 %v72
    %v329 = vunpack.c.l.bf16 %v73
    %v330 = vunpack.c.l.bf16 %v74
    %v331 = vunpack.c.l.bf16 %v75
    %v332 = vunpack.c.l.bf16 %v76
    %v333 = vunpack.c.l.bf16 %v77
    %v334 = vunpack.c.l.bf16 %v78
    %v335 = vunpack.c.l.bf16 %v79
    %v336 = vunpack.c.l.bf16 %v80
    %v337 = vunpack.c.l.bf16 %v81
    %v338 = vunpack.c.l.bf16 %v82
    %v339 = vunpack.c.l.bf16 %v83
    %v340 = vunpack.c.l.bf16 %v84
    %v341 = vunpack.c.l.bf16 %v85
    %v342 = vunpack.c.l.bf16 %v86
    %v343 = vunpack.c.l.bf16 %v87
    %v344 = vunpack.c.l.bf16 %v88
    %v345 = vunpack.c.l.bf16 %v89
    %v346 = vunpack.c.l.bf16 %v90
    %v347 = vunpack.c.l.bf16 %v91
    %v348 = vunpack.c.l.bf16 %v92
    %v349 = vunpack.c.l.bf16 %v93
    %v350 = vunpack.c.l.bf16 %v94
    %v351 = vunpack.c.l.bf16 %v95
    %v352 = vunpack.c.l.bf16 %v96
    %v353 = vunpack.c.l.bf16 %v97
    %v354 = vunpack.c.l.bf16 %v98
    %v355 = vunpack.c.l.bf16 %v99
    %v356 = vunpack.c.l.bf16 %v100
    %v357 = vunpack.c.l.bf16 %v101
    %v358 = vunpack.c.l.bf16 %v102
    %v359 = vunpack.c.l.bf16 %v103
    %v360 = vunpack.c.l.bf16 %v104
    %v361 = vunpack.c.l.bf16 %v105
    %v362 = vunpack.c.l.bf16 %v106
    %v363 = vunpack.c.l.bf16 %v107
    %v364 = vunpack.c.l.bf16 %v108
    %v365 = vunpack.c.l.bf16 %v109
    %v366 = vunpack.c.l.bf16 %v110
    %v367 = vunpack.c.l.bf16 %v111
    %v368 = vunpack.c.l.bf16 %v112
    %v369 = vunpack.c.l.bf16 %v113
    %v370 = vunpack.c.l.bf16 %v114
    %v371 = vunpack.c.l.bf16 %v115
    %v372 = vunpack.c.l.bf16 %v116
    %v373 = vunpack.c.l.bf16 %v117
    %v374 = vunpack.c.l.bf16 %v118
    %v375 = vunpack.c.l.bf16 %v119
    %v376 = vunpack.c.l.bf16 %v120
    %v377 = vunpack.c.l.bf16 %v121
    %v378 = vunpack.c.l.bf16 %v122
    %v379 = vunpack.c.l.bf16 %v123
    %v380 = vunpack.c.l.bf16 %v124
    %v381 = vunpack.c.l.bf16 %v125
    %v382 = vunpack.c.l.bf16 %v126
    %v383 = vunpack.c.l.bf16 %v127
    %v384 = vunpack.c.l.bf16 %v128
    %v385 = vunpack.c.l.bf16 %v129
    %v386 = vunpack.c.l.bf16 %v130
    %v387 = vunpack.c.l.bf16 %v131
    %v388 = vunpack.c.l.bf16 %v132
    %v389 = vunpack.c.l.bf16 %v133
    %v390 = vunpack.c.l.bf16 %v134
    %v391 = vunpack.c.l.bf16 %v135
    %v392 = vunpack.c.l.bf16 %v136
    %v393 = vunpack.c.l.bf16 %v137
    %v394 = vunpack.c.l.bf16 %v138
    %v395 = vunpack.c.l.bf16 %v139
    %v396 = vunpack.c.l.bf16 %v140
    %v397 = vunpack.c.l.bf16 %v141
    %v398 = vunpack.c.l.bf16 %v142
    %v399 = vunpack.c.l.bf16 %v143
    %v400 = vunpack.c.l.bf16 %v144
    %v401 = vunpack.c.l.bf16 %v145
    %v402 = vunpack.c.l.bf16 %v146
    %v403 = vunpack.c.l.bf16 %v147
    %v404 = vunpack.c.l.bf16 %v148
    %v405 = vunpack.c.l.bf16 %v149
    %v406 = vunpack.c.l.bf16 %v150
    %v407 = vunpack.c.l.bf16 %v151
    %v408 = vunpack.c.l.bf16 %v152
    %v409 = vunpack.c.l.bf16 %v153
    %v410 = vunpack.c.l.bf16 %v154
    %v411 = vunpack.c.l.bf16 %v155
    %v412 = vunpack.c.l.bf16 %v156
    %v413 = vunpack.c.l.bf16 %v157
    %v414 = vunpack.c.l.bf16 %v158
    %v415 = vunpack.c.l.bf16 %v159
    %v416 = vunpack.c.l.bf16 %v160
    %v417 = vunpack.c.l.bf16 %v161
    %v418 = vunpack.c.l.bf16 %v162
    %v419 = vunpack.c.l.bf16 %v163
    %v420 = vunpack.c.l.bf16 %v164
    %v421 = vunpack.c.l.bf16 %v165
    %v422 = vunpack.c.l.bf16 %v166
    %v423 = vunpack.c.l.bf16 %v167
    %v424 = vunpack.c.l.bf16 %v168
    %v425 = vunpack.c.l.bf16 %v169
    %v426 = vunpack.c.l.bf16 %v170
    %v427 = vunpack.c.l.bf16 %v171
    %v428 = vunpack.c.l.bf16 %v172
    %v429 = vunpack.c.l.bf16 %v173
    %v430 = vunpack.c.l.bf16 %v174
    %v431 = vunpack.c.l.bf16 %v175
    %v432 = vunpack.c.l.bf16 %v176
    %v433 = vunpack.c.l.bf16 %v177
    %v434 = vunpack.c.l.bf16 %v178
    %v435 = vunpack.c.l.bf16 %v179
    %v436 = vunpack.c.l.bf16 %v180
    %v437 = vunpack.c.l.bf16 %v181
    %v438 = vunpack.c.l.bf16 %v182
    %v439 = vunpack.c.l.bf16 %v183
    %v440 = vunpack.c.l.bf16 %v184
    %v441 = vunpack.c.l.bf16 %v185
    %v442 = vunpack.c.l.bf16 %v186
    %v443 = vunpack.c.l.bf16 %v187
    %v444 = vunpack.c.l.bf16 %v188
    %v445 = vunpack.c.l.bf16 %v189
    %v446 = vunpack.c.l.bf16 %v190
    %v447 = vunpack.c.l.bf16 %v191
    %v448 = vunpack.c.l.bf16 %v192
    %v449 = vunpack.c.l.bf16 %v193
    %v450 = vunpack.c.l.bf16 %v194
    %v451 = vunpack.c.l.bf16 %v195
    %v452 = vunpack.c.l.bf16 %v196
    %v453 = vunpack.c.l.bf16 %v197
    %v454 = vunpack.c.l.bf16 %v198
    %v455 = vunpack.c.l.bf16 %v199
    %v456 = vunpack.c.l.bf16 %v200
    %v457 = vunpack.c.l.bf16 %v201
    %v458 = vunpack.c.l.bf16 %v202
    %v459 = vunpack.c.l.bf16 %v203
    %v460 = vunpack.c.l.bf16 %v204
    %v461 = vunpack.c.l.bf16 %v205
    %v462 = vunpack.c.l.bf16 %v206
    %v463 = vunpack.c.l.bf16 %v207
    %v464 = vunpack.c.l.bf16 %v208
    %v465 = vunpack.c.l.bf16 %v209
    %v466 = vunpack.c.l.bf16 %v210
    %v467 = vunpack.c.l.bf16 %v211
    %v468 = vunpack.c.l.bf16 %v212
    %v469 = vunpack.c.l.bf16 %v213
    %v470 = vunpack.c.l.bf16 %v214
    %v471 = vunpack.c.l.bf16 %v215
    %v472 = vunpack.c.l.bf16 %v216
    %v473 = vunpack.c.l.bf16 %v217
    %v474 = vunpack.c.l.bf16 %v218
    %v475 = vunpack.c.l.bf16 %v219
    %v476 = vunpack.c.l.bf16 %v220
    %v477 = vunpack.c.l.bf16 %v221
    %v478 = vunpack.c.l.bf16 %v222
    %v479 = vunpack.c.l.bf16 %v223
    %v480 = vunpack.c.l.bf16 %v224
    %v481 = vunpack.c.l.bf16 %v225
    %v482 = vunpack.c.l.bf16 %v226
    %v483 = vunpack.c.l.bf16 %v227
    %v484 = vunpack.c.l.bf16 %v228
    %v485 = vunpack.c.l.bf16 %v229
    %v486 = vunpack.c.l.bf16 %v230
    %v487 = vunpack.c.l.bf16 %v231
    %v488 = vunpack.c.l.bf16 %v232
    %v489 = vunpack.c.l.bf16 %v233
    %v490 = vunpack.c.l.bf16 %v234
    %v491 = vunpack.c.l.bf16 %v235
    %v492 = vunpack.c.l.bf16 %v236
    %v493 = vunpack.c.l.bf16 %v237
    %v494 = vunpack.c.l.bf16 %v238
    %v495 = vunpack.c.l.bf16 %v239
    %v496 = vunpack.c.l.bf16 %v240
    %v497 = vunpack.c.l.bf16 %v241
    %v498 = vunpack.c.l.bf16 %v242
    %v499 = vunpack.c.l.bf16 %v243
    %v500 = vunpack.c.l.bf16 %v244
    %v501 = vunpack.c.l.bf16 %v245
    %v502 = vunpack.c.l.bf16 %v246
    %v503 = vunpack.c.l.bf16 %v247
    %v504 = vunpack.c.l.bf16 %v248
    %v505 = vunpack.c.l.bf16 %v249
    %v506 = vunpack.c.l.bf16 %v250
    %v507 = vunpack.c.l.bf16 %v251
    %v508 = vunpack.c.l.bf16 %v252
    %v509 = vunpack.c.l.bf16 %v253
    %v510 = vunpack.c.l.bf16 %v254
    %v511 = vunpack.c.l.bf16 %v255
    %v512 = vunpack.c.l.bf16 %v256
    %v513 = vunpack.c.l.bf16 %v257
    %v514 = vunpack.c.l.bf16 %v258
    %v515 = vunpack.c.l.bf16 %v259
    %v516 = vunpack.c.l.bf16 %v260
    %v517 = vunpack.c.l.bf16 %v261
    %v518 = vunpack.c.l.bf16 %v262
    %v519 = vunpack.c.l.bf16 %v263
    %v520 = vunpack.c.l.bf16 %v264
    %v521 = vunpack.c.l.bf16 %v265
    %v522 = vunpack.c.l.bf16 %v266
    %v523 = vunpack.c.l.bf16 %v267
    %v524 = vunpack.c.l.bf16 %v268
    %v525 = vunpack.c.l.bf16 %v269
    %v526 = vunpack.c.l.bf16 %v270
    %v527 = vunpack.c.l.bf16 %v271
    %v528 = vunpack.c.l.bf16 %v272
    %v529 = vunpack.c.l.bf16 %v273
    %v530 = vunpack.c.l.bf16 %v274
    %v531 = vunpack.c.l.bf16 %v275
    %v532 = vunpack.c.l.bf16 %v276
    %v533 = vunpack.c.l.bf16 %v277
    %v534 = vunpack.c.l.bf16 %v278
    %vm535 = vcmask 261120
    %v536 = vsel %vm535, %v279, 0.0
    %v537 = vsel %vm535, %v280, 0.0
    %v538 = vadd.f32 %v536, %v537
    %v539 = vsel %vm535, %v281, 0.0
    %v540 = vadd.f32 %v538, %v539
    %v541 = vsel %vm535, %v282, 0.0
    %v542 = vadd.f32 %v540, %v541
    %v543 = vsel %vm535, %v283, 0.0
    %v544 = vadd.f32 %v542, %v543
    %v545 = vsel %vm535, %v284, 0.0
    %v546 = vadd.f32 %v544, %v545
    %v547 = vsel %vm535, %v285, 0.0
    %v548 = vadd.f32 %v546, %v547
    %v549 = vsel %vm535, %v286, 0.0
    %v550 = vadd.f32 %v548, %v549
    %v551 = vsel %vm535, %v287, 0.0
    %v552 = vadd.f32 %v550, %v551
    %v553 = vsel %vm535, %v288, 0.0
    %v554 = vadd.f32 %v552, %v553
    %v555 = vsel %vm535, %v289, 0.0
    %v556 = vadd.f32 %v554, %v555
    %v557 = vsel %vm535, %v290, 0.0
    %v558 = vadd.f32 %v556, %v557
    %v559 = vsel %vm535, %v291, 0.0
    %v560 = vadd.f32 %v558, %v559
    %v561 = vsel %vm535, %v292, 0.0
    %v562 = vadd.f32 %v560, %v561
    %v563 = vsel %vm535, %v293, 0.0
    %v564 = vadd.f32 %v562, %v563
    %v565 = vsel %vm535, %v294, 0.0
    %v566 = vadd.f32 %v564, %v565
    %v567 = vsel %vm535, %v295, 0.0
    %v568 = vadd.f32 %v566, %v567
    %v569 = vsel %vm535, %v296, 0.0
    %v570 = vadd.f32 %v568, %v569
    %v571 = vsel %vm535, %v297, 0.0
    %v572 = vadd.f32 %v570, %v571
    %v573 = vsel %vm535, %v298, 0.0
    %v574 = vadd.f32 %v572, %v573
    %v575 = vsel %vm535, %v299, 0.0
    %v576 = vadd.f32 %v574, %v575
    %v577 = vsel %vm535, %v300, 0.0
    %v578 = vadd.f32 %v576, %v577
    %v579 = vsel %vm535, %v301, 0.0
    %v580 = vadd.f32 %v578, %v579
    %v581 = vsel %vm535, %v302, 0.0
    %v582 = vadd.f32 %v580, %v581
    %v583 = vsel %vm535, %v303, 0.0
    %v584 = vadd.f32 %v582, %v583
    %v585 = vsel %vm535, %v304, 0.0
    %v586 = vadd.f32 %v584, %v585
    %v587 = vsel %vm535, %v305, 0.0
    %v588 = vadd.f32 %v586, %v587
    %v589 = vsel %vm535, %v306, 0.0
    %v590 = vadd.f32 %v588, %v589
    %v591 = vsel %vm535, %v307, 0.0
    %v592 = vadd.f32 %v590, %v591
    %v593 = vsel %vm535, %v308, 0.0
    %v594 = vadd.f32 %v592, %v593
    %v595 = vsel %vm535, %v309, 0.0
    %v596 = vadd.f32 %v594, %v595
    %v597 = vsel %vm535, %v310, 0.0
    %v598 = vadd.f32 %v596, %v597
    %v599 = vrot.slane %v598, 4
    %v600 = vadd.f32 %v598, %v599
    %v601 = vrot.slane %v600, 2
    %v602 = vadd.f32 %v600, %v601
    %v603 = vrot.slane %v602, 1
    %v604 = vadd.f32 %v602, %v603
    %v605 = vsel %vm535, %v311, 0.0
    %v606 = vsel %vm535, %v312, 0.0
    %v607 = vadd.f32 %v605, %v606
    %v608 = vsel %vm535, %v313, 0.0
    %v609 = vadd.f32 %v607, %v608
    %v610 = vsel %vm535, %v314, 0.0
    %v611 = vadd.f32 %v609, %v610
    %v612 = vsel %vm535, %v315, 0.0
    %v613 = vadd.f32 %v611, %v612
    %v614 = vsel %vm535, %v316, 0.0
    %v615 = vadd.f32 %v613, %v614
    %v616 = vsel %vm535, %v317, 0.0
    %v617 = vadd.f32 %v615, %v616
    %v618 = vsel %vm535, %v318, 0.0
    %v619 = vadd.f32 %v617, %v618
    %v620 = vsel %vm535, %v319, 0.0
    %v621 = vadd.f32 %v619, %v620
    %v622 = vsel %vm535, %v320, 0.0
    %v623 = vadd.f32 %v621, %v622
    %v624 = vsel %vm535, %v321, 0.0
    %v625 = vadd.f32 %v623, %v624
    %v626 = vsel %vm535, %v322, 0.0
    %v627 = vadd.f32 %v625, %v626
    %v628 = vsel %vm535, %v323, 0.0
    %v629 = vadd.f32 %v627, %v628
    %v630 = vsel %vm535, %v324, 0.0
    %v631 = vadd.f32 %v629, %v630
    %v632 = vsel %vm535, %v325, 0.0
    %v633 = vadd.f32 %v631, %v632
    %v634 = vsel %vm535, %v326, 0.0
    %v635 = vadd.f32 %v633, %v634
    %v636 = vsel %vm535, %v327, 0.0
    %v637 = vadd.f32 %v635, %v636
    %v638 = vsel %vm535, %v328, 0.0
    %v639 = vadd.f32 %v637, %v638
    %v640 = vsel %vm535, %v329, 0.0
    %v641 = vadd.f32 %v639, %v640
    %v642 = vsel %vm535, %v330, 0.0
    %v643 = vadd.f32 %v641, %v642
    %v644 = vsel %vm535, %v331, 0.0
    %v645 = vadd.f32 %v643, %v644
    %v646 = vsel %vm535, %v332, 0.0
    %v647 = vadd.f32 %v645, %v646
    %v648 = vsel %vm535, %v333, 0.0
    %v649 = vadd.f32 %v647, %v648
    %v650 = vsel %vm535, %v334, 0.0
    %v651 = vadd.f32 %v649, %v650
    %v652 = vsel %vm535, %v335, 0.0
    %v653 = vadd.f32 %v651, %v652
    %v654 = vsel %vm535, %v336, 0.0
    %v655 = vadd.f32 %v653, %v654
    %v656 = vsel %vm535, %v337, 0.0
    %v657 = vadd.f32 %v655, %v656
    %v658 = vsel %vm535, %v338, 0.0
    %v659 = vadd.f32 %v657, %v658
    %v660 = vsel %vm535, %v339, 0.0
    %v661 = vadd.f32 %v659, %v660
    %v662 = vsel %vm535, %v340, 0.0
    %v663 = vadd.f32 %v661, %v662
    %v664 = vsel %vm535, %v341, 0.0
    %v665 = vadd.f32 %v663, %v664
    %v666 = vsel %vm535, %v342, 0.0
    %v667 = vadd.f32 %v665, %v666
    %v668 = vrot.slane %v667, 4
    %v669 = vadd.f32 %v667, %v668
    %v670 = vrot.slane %v669, 2
    %v671 = vadd.f32 %v669, %v670
    %v672 = vrot.slane %v671, 1
    %v673 = vadd.f32 %v671, %v672
    %v674 = vsel %vm535, %v343, 0.0
    %v675 = vsel %vm535, %v344, 0.0
    %v676 = vadd.f32 %v674, %v675
    %v677 = vsel %vm535, %v345, 0.0
    %v678 = vadd.f32 %v676, %v677
    %v679 = vsel %vm535, %v346, 0.0
    %v680 = vadd.f32 %v678, %v679
    %v681 = vsel %vm535, %v347, 0.0
    %v682 = vadd.f32 %v680, %v681
    %v683 = vsel %vm535, %v348, 0.0
    %v684 = vadd.f32 %v682, %v683
    %v685 = vsel %vm535, %v349, 0.0
    %v686 = vadd.f32 %v684, %v685
    %v687 = vsel %vm535, %v350, 0.0
    %v688 = vadd.f32 %v686, %v687
    %v689 = vsel %vm535, %v351, 0.0
    %v690 = vadd.f32 %v688, %v689
    %v691 = vsel %vm535, %v352, 0.0
    %v692 = vadd.f32 %v690, %v691
    %v693 = vsel %vm535, %v353, 0.0
    %v694 = vadd.f32 %v692, %v693
    %v695 = vsel %vm535, %v354, 0.0
    %v696 = vadd.f32 %v694, %v695
    %v697 = vsel %vm535, %v355, 0.0
    %v698 = vadd.f32 %v696, %v697
    %v699 = vsel %vm535, %v356, 0.0
    %v700 = vadd.f32 %v698, %v699
    %v701 = vsel %vm535, %v357, 0.0
    %v702 = vadd.f32 %v700, %v701
    %v703 = vsel %vm535, %v358, 0.0
    %v704 = vadd.f32 %v702, %v703
    %v705 = vsel %vm535, %v359, 0.0
    %v706 = vadd.f32 %v704, %v705
    %v707 = vsel %vm535, %v360, 0.0
    %v708 = vadd.f32 %v706, %v707
    %v709 = vsel %vm535, %v361, 0.0
    %v710 = vadd.f32 %v708, %v709
    %v711 = vsel %vm535, %v362, 0.0
    %v712 = vadd.f32 %v710, %v711
    %v713 = vsel %vm535, %v363, 0.0
    %v714 = vadd.f32 %v712, %v713
    %v715 = vsel %vm535, %v364, 0.0
    %v716 = vadd.f32 %v714, %v715
    %v717 = vsel %vm535, %v365, 0.0
    %v718 = vadd.f32 %v716, %v717
    %v719 = vsel %vm535, %v366, 0.0
    %v720 = vadd.f32 %v718, %v719
    %v721 = vsel %vm535, %v367, 0.0
    %v722 = vadd.f32 %v720, %v721
    %v723 = vsel %vm535, %v368, 0.0
    %v724 = vadd.f32 %v722, %v723
    %v725 = vsel %vm535, %v369, 0.0
    %v726 = vadd.f32 %v724, %v725
    %v727 = vsel %vm535, %v370, 0.0
    %v728 = vadd.f32 %v726, %v727
    %v729 = vsel %vm535, %v371, 0.0
    %v730 = vadd.f32 %v728, %v729
    %v731 = vsel %vm535, %v372, 0.0
    %v732 = vadd.f32 %v730, %v731
    %v733 = vsel %vm535, %v373, 0.0
    %v734 = vadd.f32 %v732, %v733
    %v735 = vsel %vm535, %v374, 0.0
    %v736 = vadd.f32 %v734, %v735
    %v737 = vrot.slane %v736, 4
    %v738 = vadd.f32 %v736, %v737
    %v739 = vrot.slane %v738, 2
    %v740 = vadd.f32 %v738, %v739
    %v741 = vrot.slane %v740, 1
    %v742 = vadd.f32 %v740, %v741
    %v743 = vsel %vm535, %v375, 0.0
    %v744 = vsel %vm535, %v376, 0.0
    %v745 = vadd.f32 %v743, %v744
    %v746 = vsel %vm535, %v377, 0.0
    %v747 = vadd.f32 %v745, %v746
    %v748 = vsel %vm535, %v378, 0.0
    %v749 = vadd.f32 %v747, %v748
    %v750 = vsel %vm535, %v379, 0.0
    %v751 = vadd.f32 %v749, %v750
    %v752 = vsel %vm535, %v380, 0.0
    %v753 = vadd.f32 %v751, %v752
    %v754 = vsel %vm535, %v381, 0.0
    %v755 = vadd.f32 %v753, %v754
    %v756 = vsel %vm535, %v382, 0.0
    %v757 = vadd.f32 %v755, %v756
    %v758 = vsel %vm535, %v383, 0.0
    %v759 = vadd.f32 %v757, %v758
    %v760 = vsel %vm535, %v384, 0.0
    %v761 = vadd.f32 %v759, %v760
    %v762 = vsel %vm535, %v385, 0.0
    %v763 = vadd.f32 %v761, %v762
    %v764 = vsel %vm535, %v386, 0.0
    %v765 = vadd.f32 %v763, %v764
    %v766 = vsel %vm535, %v387, 0.0
    %v767 = vadd.f32 %v765, %v766
    %v768 = vsel %vm535, %v388, 0.0
    %v769 = vadd.f32 %v767, %v768
    %v770 = vsel %vm535, %v389, 0.0
    %v771 = vadd.f32 %v769, %v770
    %v772 = vsel %vm535, %v390, 0.0
    %v773 = vadd.f32 %v771, %v772
    %v774 = vsel %vm535, %v391, 0.0
    %v775 = vadd.f32 %v773, %v774
    %v776 = vsel %vm535, %v392, 0.0
    %v777 = vadd.f32 %v775, %v776
    %v778 = vsel %vm535, %v393, 0.0
    %v779 = vadd.f32 %v777, %v778
    %v780 = vsel %vm535, %v394, 0.0
    %v781 = vadd.f32 %v779, %v780
    %v782 = vsel %vm535, %v395, 0.0
    %v783 = vadd.f32 %v781, %v782
    %v784 = vsel %vm535, %v396, 0.0
    %v785 = vadd.f32 %v783, %v784
    %v786 = vsel %vm535, %v397, 0.0
    %v787 = vadd.f32 %v785, %v786
    %v788 = vsel %vm535, %v398, 0.0
    %v789 = vadd.f32 %v787, %v788
    %v790 = vsel %vm535, %v399, 0.0
    %v791 = vadd.f32 %v789, %v790
    %v792 = vsel %vm535, %v400, 0.0
    %v793 = vadd.f32 %v791, %v792
    %v794 = vsel %vm535, %v401, 0.0
    %v795 = vadd.f32 %v793, %v794
    %v796 = vsel %vm535, %v402, 0.0
    %v797 = vadd.f32 %v795, %v796
    %v798 = vsel %vm535, %v403, 0.0
    %v799 = vadd.f32 %v797, %v798
    %v800 = vsel %vm535, %v404, 0.0
    %v801 = vadd.f32 %v799, %v800
    %v802 = vsel %vm535, %v405, 0.0
    %v803 = vadd.f32 %v801, %v802
    %v804 = vsel %vm535, %v406, 0.0
    %v805 = vadd.f32 %v803, %v804
    %v806 = vrot.slane %v805, 4
    %v807 = vadd.f32 %v805, %v806
    %v808 = vrot.slane %v807, 2
    %v809 = vadd.f32 %v807, %v808
    %v810 = vrot.slane %v809, 1
    %v811 = vadd.f32 %v809, %v810
    %v812 = vsel %vm535, %v407, 0.0
    %v813 = vsel %vm535, %v408, 0.0
    %v814 = vadd.f32 %v812, %v813
    %v815 = vsel %vm535, %v409, 0.0
    %v816 = vadd.f32 %v814, %v815
    %v817 = vsel %vm535, %v410, 0.0
    %v818 = vadd.f32 %v816, %v817
    %v819 = vsel %vm535, %v411, 0.0
    %v820 = vadd.f32 %v818, %v819
    %v821 = vsel %vm535, %v412, 0.0
    %v822 = vadd.f32 %v820, %v821
    %v823 = vsel %vm535, %v413, 0.0
    %v824 = vadd.f32 %v822, %v823
    %v825 = vsel %vm535, %v414, 0.0
    %v826 = vadd.f32 %v824, %v825
    %v827 = vsel %vm535, %v415, 0.0
    %v828 = vadd.f32 %v826, %v827
    %v829 = vsel %vm535, %v416, 0.0
    %v830 = vadd.f32 %v828, %v829
    %v831 = vsel %vm535, %v417, 0.0
    %v832 = vadd.f32 %v830, %v831
    %v833 = vsel %vm535, %v418, 0.0
    %v834 = vadd.f32 %v832, %v833
    %v835 = vsel %vm535, %v419, 0.0
    %v836 = vadd.f32 %v834, %v835
    %v837 = vsel %vm535, %v420, 0.0
    %v838 = vadd.f32 %v836, %v837
    %v839 = vsel %vm535, %v421, 0.0
    %v840 = vadd.f32 %v838, %v839
    %v841 = vsel %vm535, %v422, 0.0
    %v842 = vadd.f32 %v840, %v841
    %v843 = vsel %vm535, %v423, 0.0
    %v844 = vadd.f32 %v842, %v843
    %v845 = vsel %vm535, %v424, 0.0
    %v846 = vadd.f32 %v844, %v845
    %v847 = vsel %vm535, %v425, 0.0
    %v848 = vadd.f32 %v846, %v847
    %v849 = vsel %vm535, %v426, 0.0
    %v850 = vadd.f32 %v848, %v849
    %v851 = vsel %vm535, %v427, 0.0
    %v852 = vadd.f32 %v850, %v851
    %v853 = vsel %vm535, %v428, 0.0
    %v854 = vadd.f32 %v852, %v853
    %v855 = vsel %vm535, %v429, 0.0
    %v856 = vadd.f32 %v854, %v855
    %v857 = vsel %vm535, %v430, 0.0
    %v858 = vadd.f32 %v856, %v857
    %v859 = vsel %vm535, %v431, 0.0
    %v860 = vadd.f32 %v858, %v859
    %v861 = vsel %vm535, %v432, 0.0
    %v862 = vadd.f32 %v860, %v861
    %v863 = vsel %vm535, %v433, 0.0
    %v864 = vadd.f32 %v862, %v863
    %v865 = vsel %vm535, %v434, 0.0
    %v866 = vadd.f32 %v864, %v865
    %v867 = vsel %vm535, %v435, 0.0
    %v868 = vadd.f32 %v866, %v867
    %v869 = vsel %vm535, %v436, 0.0
    %v870 = vadd.f32 %v868, %v869
    %v871 = vsel %vm535, %v437, 0.0
    %v872 = vadd.f32 %v870, %v871
    %v873 = vsel %vm535, %v438, 0.0
    %v874 = vadd.f32 %v872, %v873
    %v875 = vrot.slane %v874, 4
    %v876 = vadd.f32 %v874, %v875
    %v877 = vrot.slane %v876, 2
    %v878 = vadd.f32 %v876, %v877
    %v879 = vrot.slane %v878, 1
    %v880 = vadd.f32 %v878, %v879
    %v881 = vsel %vm535, %v439, 0.0
    %v882 = vsel %vm535, %v440, 0.0
    %v883 = vadd.f32 %v881, %v882
    %v884 = vsel %vm535, %v441, 0.0
    %v885 = vadd.f32 %v883, %v884
    %v886 = vsel %vm535, %v442, 0.0
    %v887 = vadd.f32 %v885, %v886
    %v888 = vsel %vm535, %v443, 0.0
    %v889 = vadd.f32 %v887, %v888
    %v890 = vsel %vm535, %v444, 0.0
    %v891 = vadd.f32 %v889, %v890
    %v892 = vsel %vm535, %v445, 0.0
    %v893 = vadd.f32 %v891, %v892
    %v894 = vsel %vm535, %v446, 0.0
    %v895 = vadd.f32 %v893, %v894
    %v896 = vsel %vm535, %v447, 0.0
    %v897 = vadd.f32 %v895, %v896
    %v898 = vsel %vm535, %v448, 0.0
    %v899 = vadd.f32 %v897, %v898
    %v900 = vsel %vm535, %v449, 0.0
    %v901 = vadd.f32 %v899, %v900
    %v902 = vsel %vm535, %v450, 0.0
    %v903 = vadd.f32 %v901, %v902
    %v904 = vsel %vm535, %v451, 0.0
    %v905 = vadd.f32 %v903, %v904
    %v906 = vsel %vm535, %v452, 0.0
    %v907 = vadd.f32 %v905, %v906
    %v908 = vsel %vm535, %v453, 0.0
    %v909 = vadd.f32 %v907, %v908
    %v910 = vsel %vm535, %v454, 0.0
    %v911 = vadd.f32 %v909, %v910
    %v912 = vsel %vm535, %v455, 0.0
    %v913 = vadd.f32 %v911, %v912
    %v914 = vsel %vm535, %v456, 0.0
    %v915 = vadd.f32 %v913, %v914
    %v916 = vsel %vm535, %v457, 0.0
    %v917 = vadd.f32 %v915, %v916
    %v918 = vsel %vm535, %v458, 0.0
    %v919 = vadd.f32 %v917, %v918
    %v920 = vsel %vm535, %v459, 0.0
    %v921 = vadd.f32 %v919, %v920
    %v922 = vsel %vm535, %v460, 0.0
    %v923 = vadd.f32 %v921, %v922
    %v924 = vsel %vm535, %v461, 0.0
    %v925 = vadd.f32 %v923, %v924
    %v926 = vsel %vm535, %v462, 0.0
    %v927 = vadd.f32 %v925, %v926
    %v928 = vsel %vm535, %v463, 0.0
    %v929 = vadd.f32 %v927, %v928
    %v930 = vsel %vm535, %v464, 0.0
    %v931 = vadd.f32 %v929, %v930
    %v932 = vsel %vm535, %v465, 0.0
    %v933 = vadd.f32 %v931, %v932
    %v934 = vsel %vm535, %v466, 0.0
    %v935 = vadd.f32 %v933, %v934
    %v936 = vsel %vm535, %v467, 0.0
    %v937 = vadd.f32 %v935, %v936
    %v938 = vsel %vm535, %v468, 0.0
    %v939 = vadd.f32 %v937, %v938
    %v940 = vsel %vm535, %v469, 0.0
    %v941 = vadd.f32 %v939, %v940
    %v942 = vsel %vm535, %v470, 0.0
    %v943 = vadd.f32 %v941, %v942
    %v944 = vrot.slane %v943, 4
    %v945 = vadd.f32 %v943, %v944
    %v946 = vrot.slane %v945, 2
    %v947 = vadd.f32 %v945, %v946
    %v948 = vrot.slane %v947, 1
    %v949 = vadd.f32 %v947, %v948
    %v950 = vsel %vm535, %v471, 0.0
    %v951 = vsel %vm535, %v472, 0.0
    %v952 = vadd.f32 %v950, %v951
    %v953 = vsel %vm535, %v473, 0.0
    %v954 = vadd.f32 %v952, %v953
    %v955 = vsel %vm535, %v474, 0.0
    %v956 = vadd.f32 %v954, %v955
    %v957 = vsel %vm535, %v475, 0.0
    %v958 = vadd.f32 %v956, %v957
    %v959 = vsel %vm535, %v476, 0.0
    %v960 = vadd.f32 %v958, %v959
    %v961 = vsel %vm535, %v477, 0.0
    %v962 = vadd.f32 %v960, %v961
    %v963 = vsel %vm535, %v478, 0.0
    %v964 = vadd.f32 %v962, %v963
    %v965 = vsel %vm535, %v479, 0.0
    %v966 = vadd.f32 %v964, %v965
    %v967 = vsel %vm535, %v480, 0.0
    %v968 = vadd.f32 %v966, %v967
    %v969 = vsel %vm535, %v481, 0.0
    %v970 = vadd.f32 %v968, %v969
    %v971 = vsel %vm535, %v482, 0.0
    %v972 = vadd.f32 %v970, %v971
    %v973 = vsel %vm535, %v483, 0.0
    %v974 = vadd.f32 %v972, %v973
    %v975 = vsel %vm535, %v484, 0.0
    %v976 = vadd.f32 %v974, %v975
    %v977 = vsel %vm535, %v485, 0.0
    %v978 = vadd.f32 %v976, %v977
    %v979 = vsel %vm535, %v486, 0.0
    %v980 = vadd.f32 %v978, %v979
    %v981 = vsel %vm535, %v487, 0.0
    %v982 = vadd.f32 %v980, %v981
    %v983 = vsel %vm535, %v488, 0.0
    %v984 = vadd.f32 %v982, %v983
    %v985 = vsel %vm535, %v489, 0.0
    %v986 = vadd.f32 %v984, %v985
    %v987 = vsel %vm535, %v490, 0.0
    %v988 = vadd.f32 %v986, %v987
    %v989 = vsel %vm535, %v491, 0.0
    %v990 = vadd.f32 %v988, %v989
    %v991 = vsel %vm535, %v492, 0.0
    %v992 = vadd.f32 %v990, %v991
    %v993 = vsel %vm535, %v493, 0.0
    %v994 = vadd.f32 %v992, %v993
    %v995 = vsel %vm535, %v494, 0.0
    %v996 = vadd.f32 %v994, %v995
    %v997 = vsel %vm535, %v495, 0.0
    %v998 = vadd.f32 %v996, %v997
    %v999 = vsel %vm535, %v496, 0.0
    %v1000 = vadd.f32 %v998, %v999
    %v1001 = vsel %vm535, %v497, 0.0
    %v1002 = vadd.f32 %v1000, %v1001
    %v1003 = vsel %vm535, %v498, 0.0
    %v1004 = vadd.f32 %v1002, %v1003
    %v1005 = vsel %vm535, %v499, 0.0
    %v1006 = vadd.f32 %v1004, %v1005
    %v1007 = vsel %vm535, %v500, 0.0
    %v1008 = vadd.f32 %v1006, %v1007
    %v1009 = vsel %vm535, %v501, 0.0
    %v1010 = vadd.f32 %v1008, %v1009
    %v1011 = vsel %vm535, %v502, 0.0
    %v1012 = vadd.f32 %v1010, %v1011
    %v1013 = vrot.slane %v1012, 4
    %v1014 = vadd.f32 %v1012, %v1013
    %v1015 = vrot.slane %v1014, 2
    %v1016 = vadd.f32 %v1014, %v1015
    %v1017 = vrot.slane %v1016, 1
    %v1018 = vadd.f32 %v1016, %v1017
    %v1019 = vsel %vm535, %v503, 0.0
    %v1020 = vsel %vm535, %v504, 0.0
    %v1021 = vadd.f32 %v1019, %v1020
    %v1022 = vsel %vm535, %v505, 0.0
    %v1023 = vadd.f32 %v1021, %v1022
    %v1024 = vsel %vm535, %v506, 0.0
    %v1025 = vadd.f32 %v1023, %v1024
    %v1026 = vsel %vm535, %v507, 0.0
    %v1027 = vadd.f32 %v1025, %v1026
    %v1028 = vsel %vm535, %v508, 0.0
    %v1029 = vadd.f32 %v1027, %v1028
    %v1030 = vsel %vm535, %v509, 0.0
    %v1031 = vadd.f32 %v1029, %v1030
    %v1032 = vsel %vm535, %v510, 0.0
    %v1033 = vadd.f32 %v1031, %v1032
    %v1034 = vsel %vm535, %v511, 0.0
    %v1035 = vadd.f32 %v1033, %v1034
    %v1036 = vsel %vm535, %v512, 0.0
    %v1037 = vadd.f32 %v1035, %v1036
    %v1038 = vsel %vm535, %v513, 0.0
    %v1039 = vadd.f32 %v1037, %v1038
    %v1040 = vsel %vm535, %v514, 0.0
    %v1041 = vadd.f32 %v1039, %v1040
    %v1042 = vsel %vm535, %v515, 0.0
    %v1043 = vadd.f32 %v1041, %v1042
    %v1044 = vsel %vm535, %v516, 0.0
    %v1045 = vadd.f32 %v1043, %v1044
    %v1046 = vsel %vm535, %v517, 0.0
    %v1047 = vadd.f32 %v1045, %v1046
    %v1048 = vsel %vm535, %v518, 0.0
    %v1049 = vadd.f32 %v1047, %v1048
    %v1050 = vsel %vm535, %v519, 0.0
    %v1051 = vadd.f32 %v1049, %v1050
    %v1052 = vsel %vm535, %v520, 0.0
    %v1053 = vadd.f32 %v1051, %v1052
    %v1054 = vsel %vm535, %v521, 0.0
    %v1055 = vadd.f32 %v1053, %v1054
    %v1056 = vsel %vm535, %v522, 0.0
    %v1057 = vadd.f32 %v1055, %v1056
    %v1058 = vsel %vm535, %v523, 0.0
    %v1059 = vadd.f32 %v1057, %v1058
    %v1060 = vsel %vm535, %v524, 0.0
    %v1061 = vadd.f32 %v1059, %v1060
    %v1062 = vsel %vm535, %v525, 0.0
    %v1063 = vadd.f32 %v1061, %v1062
    %v1064 = vsel %vm535, %v526, 0.0
    %v1065 = vadd.f32 %v1063, %v1064
    %v1066 = vsel %vm535, %v527, 0.0
    %v1067 = vadd.f32 %v1065, %v1066
    %v1068 = vsel %vm535, %v528, 0.0
    %v1069 = vadd.f32 %v1067, %v1068
    %v1070 = vsel %vm535, %v529, 0.0
    %v1071 = vadd.f32 %v1069, %v1070
    %v1072 = vsel %vm535, %v530, 0.0
    %v1073 = vadd.f32 %v1071, %v1072
    %v1074 = vsel %vm535, %v531, 0.0
    %v1075 = vadd.f32 %v1073, %v1074
    %v1076 = vsel %vm535, %v532, 0.0
    %v1077 = vadd.f32 %v1075, %v1076
    %v1078 = vsel %vm535, %v533, 0.0
    %v1079 = vadd.f32 %v1077, %v1078
    %v1080 = vsel %vm535, %v534, 0.0
    %v1081 = vadd.f32 %v1079, %v1080
    %v1082 = vrot.slane %v1081, 4
    %v1083 = vadd.f32 %v1081, %v1082
    %v1084 = vrot.slane %v1083, 2
    %v1085 = vadd.f32 %v1083, %v1084
    %v1086 = vrot.slane %v1085, 1
    %v1087 = vadd.f32 %v1085, %v1086
    %vm1096 = vcmask 1041409
    %v1097 = vsel %vm1096, %v673, %v604
    %vm1098 = vcmask 1042434
    %v1099 = vsel %vm1098, %v742, %v1097
    %vm1100 = vcmask 1043459
    %v1101 = vsel %vm1100, %v811, %v1099
    %vm1102 = vcmask 1044484
    %v1103 = vsel %vm1102, %v880, %v1101
    %vm1104 = vcmask 1045509
    %v1105 = vsel %vm1104, %v949, %v1103
    %vm1106 = vcmask 1046534
    %v1107 = vsel %vm1106, %v1018, %v1105
    %vm1108 = vcmask 1047559
    %v1109 = vsel %vm1108, %v1087, %v1107
    %v1111 = vadd.f32 %v22, %v1109
    %1112 = vst.msk [vmem:[#allocation2] sm:$0xff] %vm535, %v1111
    // Predicated region
    $region18: #{tpu_custom_call.1} parent=1 // pred_check
      %p1113 = pneg %p16
    $region19: #{tpu_custom_call.1} parent=1 // pred_check_branch
      %1115 = sbr.rel (%p1113) target = $region21
    $region20: #{tpu_custom_call.1} parent=1 // pred_region
      %v1116 = vld [vmem:[#allocation2] sm:$0xff]
      %v1117 = vpack.c.bf16 %v1116, %v1116
      %v1118 = vld [vmem:[%s1] sm:$0xf]
      %v1119 = vld [vmem:[%s1 + $0x4] sm:$0xf]
      %v1120 = vld [vmem:[%s1 + $0x8] sm:$0xf]
      %v1121 = vld [vmem:[%s1 + $0xc] sm:$0xf]
      %v1122 = vld [vmem:[%s2] sm:$0x1]
      %v1124 = vperm.slane %v1122, 0
      %v1130 = vunpack.c.l.b16 %v1118
      %v1131 = vunpack.c.l.b16 %v1119
      %v1132 = vunpack.c.l.b16 %v1120
      %v1133 = vunpack.c.l.b16 %v1121
      %v1134 = vpack.c.b16 %v1131, %v1130
      %v1135 = vpack.c.b16 %v1133, %v1132
      %v1139 = vsel %vm535, %v1117, 0
      %1141 = vmatpush.bf16.msra.mxu0 0
      %1142 = vmatpush.bf16.msra.mxu0 0
      %1143 = vmatpush.bf16.msra.mxu0 0
      %1144 = vmatpush.bf16.msra.mxu0 0
      %1145 = vmatpush.bf16.msra.mxu0 0
      %1146 = vmatpush.bf16.msra.mxu0 0
      %1147 = vmatpush.bf16.msra.mxu0 %v1135
      %1148 = vmatpush.bf16.msra.mxu0 %v1134
      %1149 = vmatmul.bf16.gmra.mxu0 %v1139
      %v1150 = vpop.f32.mrf.mxu0
      %v1151 = vadd.f32 %v1124, %v1150
      %v1152 = vpop.f32.mrf.mxu0
      %1153 = vdwg.mxu0
      %1154 = vst [vmem:[#allocation3] sm:$0xff] %v1151
    $region21: #{tpu_custom_call.1} parent=1 // pred_fallthru
      _
    // Predicated region
    $region22: #{tpu_custom_call.1} parent=1 // pred_check
      _
    $region23: #{tpu_custom_call.1} parent=1 // pred_check_branch
      %1156 = sbr.rel (0) target = $region25
    $region24: #{tpu_custom_call.1} parent=1 // pred_region
      %1158 = vsyncadd [#allocation4], 0
      %s1160 = sshll.u32 [#allocation3], 4
      %s1161 = int_to_ptr.vmem [resolvable:$true] %s1160
      %s1162 = sshll.u32 %s3, 4
      %s1163 = int_to_ptr.hbm [resolvable:$true] %s1162
      %1165 = dma.vmem_to_hbm [thread:$0]  %s1161, 128, %s1163, [#allocation4]
    $region25: #{tpu_custom_call.1} parent=1 // pred_fallthru
      _
    // Predicated region
    $region26: #{tpu_custom_call.1} parent=1 // pred_check
      _
    $region27: #{tpu_custom_call.1} parent=1 // pred_check_branch
      %1167 = sbr.rel (0) target = $region29
    $region28: #{tpu_custom_call.1} parent=1 // pred_region
      %1169 = dma.done [#allocation4], 128
    $region29: #{tpu_custom_call.1} parent=1 // pred_fallthru
      _
    %1170 = vsyncpa [#allocation4], 1

</llo_original>
